<compile_context>
chip_gen: v6e
topology: v6e:2x2x1
jax: 0.10.0
libtpu: 0.0.40
codegen_flags: <defaults>
</compile_context>

<pallas_src>
import jax
import jax.numpy as jnp
from jax import lax
from jax.experimental import pallas as pl
from jax.experimental.pallas import tpu as pltpu


def _round_up(x, m):
    return ((x + m - 1) // m) * m


def _loss_kernel(regret_ref, predict_ref, t_ref, out_ref, acc_ref):
    """Grid = (n_splits, steps).  Each step handles an (A, tile_n) slab where
    lanes are batch samples; acc_ref is an elementwise (A, tile_n) f32
    accumulator reduced only once at the end of each split."""
    i = pl.program_id(1)

    @pl.when(i == 0)
    def _():
        acc_ref[...] = jnp.zeros_like(acc_ref)

    d = regret_ref[...] - predict_ref[...]          # (A, tile_n) f32
    # t broadcasts (1, tile_n) over the action sublanes; pure VPU work,
    # no per-step XLU reduce, no scalar read-modify-write.
    acc_ref[...] += d * d * t_ref[...]

    @pl.when(i == pl.num_programs(1) - 1)
    def _():
        total = jnp.sum(acc_ref[...])               # single XLU reduce per split
        row = lax.broadcasted_iota(jnp.int32, (8, 128), 0)
        col = lax.broadcasted_iota(jnp.int32, (8, 128), 1)
        # One lane-dense full-tile store; partial sum lands at [0, 0].
        out_ref[...] = jnp.where((row == 0) & (col == 0), total, 0.0)


def loss_func(regret, predict, t, *, target_block_bytes=2 << 20, n_splits=2):
    """Pallas equivalent of LossFunc.forward(regret, predict, t)."""
    B, A = regret.shape
    regret = regret.astype(jnp.float32)
    predict = predict.astype(jnp.float32)

    # t may be a scalar (CFR iteration) or a per-sample weight.
    t = jnp.asarray(t, jnp.float32)
    if t.ndim == 0:
        t_vec = jnp.full((B,), t, jnp.float32)
    else:
        t_vec = jnp.broadcast_to(t.reshape(-1), (B,)).astype(jnp.float32)

    # --- tiling: batch -> lanes, actions -> sublanes -------------------------
    sub_pad = _round_up(A, 8)                       # VMEM sublane padding of a block
    max_lanes = max(128, (target_block_bytes // (sub_pad * 4)) // 128 * 128)
    tile0 = min(max_lanes, _round_up(pl.cdiv(B, n_splits), 128))
    steps = pl.cdiv(B, n_splits * tile0)            # grid steps per split
    tile_n = _round_up(pl.cdiv(B, n_splits * steps), 128)
    Bp = n_splits * steps * tile_n
    pad = Bp - B

    # Lane-dense layout: (A, Bp).  Padded columns have d == 0 and t == 0, so
    # they contribute nothing to the sum.
    regret_p = jnp.pad(regret.T, ((0, 0), (0, pad)))
    predict_p = jnp.pad(predict.T, ((0, 0), (0, pad)))
    t_p = jnp.pad(t_vec.reshape(1, B), ((0, 0), (0, pad)))

    # Explicit scoped-VMEM budget: 2 big inputs x 2 pipeline buffers + t blocks
    # + accumulator, with headroom.  Stays well under v7x's 64 MiB physical VMEM.
    blk_bytes = sub_pad * tile_n * 4
    t_blk_bytes = 8 * tile_n * 4
    vmem_need = 2 * 2 * blk_bytes + 2 * t_blk_bytes + blk_bytes + (1 << 18)
    vmem_limit = int(min(max(2 * vmem_need, 8 << 20), 48 << 20))

    out = pl.pallas_call(
        _loss_kernel,
        out_shape=jax.ShapeDtypeStruct((n_splits * 8, 128), jnp.float32),
        grid_spec=pltpu.PrefetchScalarGridSpec(
            num_scalar_prefetch=0,
            grid=(n_splits, steps),
            in_specs=[
                pl.BlockSpec((A, tile_n), lambda c, i: (0, c * steps + i)),
                pl.BlockSpec((A, tile_n), lambda c, i: (0, c * steps + i)),
                pl.BlockSpec((1, tile_n), lambda c, i: (0, c * steps + i)),
            ],
            out_specs=pl.BlockSpec((8, 128), lambda c, i: (c, 0)),
            scratch_shapes=[pltpu.VMEM((A, tile_n), jnp.float32)],
        ),
        compiler_params=pltpu.CompilerParams(
            dimension_semantics=("parallel", "arbitrary"),
            vmem_limit_bytes=vmem_limit,
        ),
    )(regret_p, predict_p, t_p)

    # Combine per-split partial sums (only [k*8, 0] entries are nonzero) and
    # divide by the true (unpadded) batch size for the mean.
    return jnp.sum(out) / jnp.float32(B)


if __name__ == "__main__":
    key = jax.random.PRNGKey(0)
    k1, k2, k3 = jax.random.split(key, 3)

    B, A = 10, 4  # small shapes: batch=10 samples, 4 actions (advantage dims)
    regret = jax.random.normal(k1, (B, A), dtype=jnp.float32)
    predict = jax.random.normal(k2, (B, A), dtype=jnp.float32)
    # CFR iteration weights (per-sample, positive)
    t = jax.random.uniform(k3, (B,), dtype=jnp.float32, minval=1.0, maxval=10.0)

    loss = loss_func(regret, predict, t)
    jax.block_until_ready(loss)

    # Reference (plain JAX) to validate semantics of the kernel.
    ref = jnp.mean(t * jnp.sum((regret - predict) ** 2, axis=1))
    assert jnp.allclose(loss, ref, rtol=1e-5, atol=1e-5), (loss, ref)

    print("KERNEL_OK")
</pallas_src>

<mosaic_0001>
module attributes {stable_mosaic.version = 11 : i64} {
  func.func @_loss_kernel(%arg0: i32, %arg1: i32, %arg2: memref<4x128xf32, #tpu.memory_space<vmem>>, %arg3: memref<4x128xf32, #tpu.memory_space<vmem>>, %arg4: memref<1x128xf32, #tpu.memory_space<vmem>>, %arg5: memref<8x128xf32, #tpu.memory_space<vmem>>, %arg6: memref<4x128xf32, #tpu.memory_space<vmem>>) attributes {dimension_semantics = [#tpu.dimension_semantics<parallel>, #tpu.dimension_semantics<arbitrary>], iteration_bounds = array<i64: 2, 1>, scalar_prefetch = 0 : i64, scratch_operands = 1 : i64, tpu.core_type = #tpu.core_type<tc>, window_params = [{transform_indices = @transform_0, window_bounds = array<i64: 4, 128>}, {transform_indices = @transform_1, window_bounds = array<i64: 4, 128>}, {transform_indices = @transform_2, window_bounds = array<i64: 1, 128>}, {transform_indices = @transform_3, window_bounds = array<i64: 8, 128>}]} {
    %c0_i32 = arith.constant 0 : i32
    %0 = arith.cmpi eq, %arg1, %c0_i32 : i32
    %1 = arith.extui %0 : i1 to i32
    %c0_i32_0 = arith.constant 0 : i32
    %2 = arith.cmpi ne, %1, %c0_i32_0 : i32
    scf.if %2 {
      %cst = arith.constant 0.000000e+00 : f32
      %16 = vector.broadcast %cst : f32 to vector<4x128xf32>
      %c0_12 = arith.constant 0 : index
      %c0_13 = arith.constant 0 : index
      %17 = vector.load %arg6[%c0_12, %c0_13] : memref<4x128xf32, #tpu.memory_space<vmem>>, vector<4x128xf32>
      tpu.vector_store %arg6[%c0_12, %c0_13], %16 {strides = array<i32>} : memref<4x128xf32, #tpu.memory_space<vmem>>, vector<4x128xf32>,
    } else {
    }
    %c0 = arith.constant 0 : index
    %c0_1 = arith.constant 0 : index
    %3 = vector.load %arg2[%c0, %c0_1] : memref<4x128xf32, #tpu.memory_space<vmem>>, vector<4x128xf32>
    %c0_2 = arith.constant 0 : index
    %c0_3 = arith.constant 0 : index
    %4 = vector.load %arg3[%c0_2, %c0_3] : memref<4x128xf32, #tpu.memory_space<vmem>>, vector<4x128xf32>
    %5 = arith.subf %3, %4 : vector<4x128xf32>
    %c0_4 = arith.constant 0 : index
    %c0_5 = arith.constant 0 : index
    %6 = vector.load %arg6[%c0_4, %c0_5] : memref<4x128xf32, #tpu.memory_space<vmem>>, vector<4x128xf32>
    %7 = arith.mulf %5, %5 : vector<4x128xf32>
    %c0_6 = arith.constant 0 : index
    %c0_7 = arith.constant 0 : index
    %8 = vector.load %arg4[%c0_6, %c0_7] : memref<1x128xf32, #tpu.memory_space<vmem>>, vector<1x128xf32>
    %9 = vector.broadcast %8 : vector<1x128xf32> to vector<4x128xf32>
    %10 = arith.mulf %7, %9 : vector<4x128xf32>
    %11 = arith.addf %6, %10 : vector<4x128xf32>
    %c0_8 = arith.constant 0 : index
    %c0_9 = arith.constant 0 : index
    %12 = vector.load %arg6[%c0_8, %c0_9] : memref<4x128xf32, #tpu.memory_space<vmem>>, vector<4x128xf32>
    tpu.vector_store %arg6[%c0_8, %c0_9], %11 {strides = array<i32>} : memref<4x128xf32, #tpu.memory_space<vmem>>, vector<4x128xf32>,
    %c0_i32_10 = arith.constant 0 : i32
    %13 = arith.cmpi eq, %arg1, %c0_i32_10 : i32
    %14 = arith.extui %13 : i1 to i32
    %c0_i32_11 = arith.constant 0 : i32
    %15 = arith.cmpi ne, %14, %c0_i32_11 : i32
    scf.if %15 {
      %c0_12 = arith.constant 0 : index
      %c0_13 = arith.constant 0 : index
      %16 = vector.load %arg6[%c0_12, %c0_13] : memref<4x128xf32, #tpu.memory_space<vmem>>, vector<4x128xf32>
      %17 = vector.shape_cast %16 : vector<4x128xf32> to vector<1x4x128xf32>
      %cst = arith.constant dense<0.000000e+00> : vector<1xf32>
      %18 = vector.multi_reduction <add>, %17, %cst [1, 2] : vector<1x4x128xf32> to vector<1xf32>
      %19 = vector.shape_cast %18 : vector<1xf32> to vector<1x1x1xf32>
      %20 = vector.extract %19[0, 0, 0] : f32 from vector<1x1x1xf32>
      %21 = tpu.iota {dimensions = array<i32: 0>} : vector<8x128xi32>
      %22 = tpu.iota {dimensions = array<i32: 1>} : vector<8x128xi32>
      %c0_i32_14 = arith.constant 0 : i32
      %23 = vector.broadcast %c0_i32_14 : i32 to vector<8x128xi32>
      %24 = arith.cmpi eq, %21, %23 : vector<8x128xi32>
      %c0_i32_15 = arith.constant 0 : i32
      %25 = vector.broadcast %c0_i32_15 : i32 to vector<8x128xi32>
      %26 = arith.cmpi eq, %22, %25 : vector<8x128xi32>
      %27 = arith.andi %24, %26 : vector<8x128xi1>
      %cst_16 = arith.constant 0.000000e+00 : f32
      %28 = vector.broadcast %20 : f32 to vector<8x128xf32>
      %29 = vector.broadcast %cst_16 : f32 to vector<8x128xf32>
      %30 = arith.select %27, %28, %29 : vector<8x128xi1>, vector<8x128xf32>
      %c0_17 = arith.constant 0 : index
      %c0_18 = arith.constant 0 : index
      %31 = vector.load %arg5[%c0_17, %c0_18] : memref<8x128xf32, #tpu.memory_space<vmem>>, vector<8x128xf32>
      tpu.vector_store %arg5[%c0_17, %c0_18], %30 {strides = array<i32>} : memref<8x128xf32, #tpu.memory_space<vmem>>, vector<8x128xf32>,
    } else {
    }
    return
  }
  func.func @transform_0(%arg0: i32, %arg1: i32) -> (i32, i32) {
    %c1_i32 = arith.constant 1 : i32
    %0 = arith.muli %arg0, %c1_i32 : i32
    %1 = arith.addi %0, %arg1 : i32
    %c0_i32 = arith.constant 0 : i32
    %c0_i32_0 = arith.constant 0 : i32
    return %c0_i32, %1 : i32, i32
  }
  func.func @transform_1(%arg0: i32, %arg1: i32) -> (i32, i32) {
    %c1_i32 = arith.constant 1 : i32
    %0 = arith.muli %arg0, %c1_i32 : i32
    %1 = arith.addi %0, %arg1 : i32
    %c0_i32 = arith.constant 0 : i32
    %c0_i32_0 = arith.constant 0 : i32
    return %c0_i32, %1 : i32, i32
  }
  func.func @transform_2(%arg0: i32, %arg1: i32) -> (i32, i32) {
    %c1_i32 = arith.constant 1 : i32
    %0 = arith.muli %arg0, %c1_i32 : i32
    %1 = arith.addi %0, %arg1 : i32
    %c0_i32 = arith.constant 0 : i32
    %c0_i32_0 = arith.constant 0 : i32
    return %c0_i32, %1 : i32, i32
  }
  func.func @transform_3(%arg0: i32, %arg1: i32) -> (i32, i32) {
    %c0_i32 = arith.constant 0 : i32
    %c0_i32_0 = arith.constant 0 : i32
    return %arg0, %c0_i32 : i32, i32
  }
}

</mosaic_0001>

<llo_original>
// kernel: tpu_custom_call.1
$region0: #{tpu_custom_call.1}
  #allocation0 [shape = 'u32[]', space=smem, size = 0x4, offset = 0x4, fixed_abs, tag = 'smem constant byte address 0x4 - core index']
  #allocation1 [shape = 'u32[144,128]{1,0:T(1,128)}', space=vmem, size = 0x12000, scoped, tag = 'internal scratch']
  #allocation2 [shape = 'f32[4,128]{1,0:T(4,128)}', space=vmem, size = 0x800, scoped, tag = 'scratch operand']
  %s0 = inlined_call_operand.hbm [shape: f32[4,256], index: 0, kind: input, shape index: {}]
  %s1 = inlined_call_operand.hbm [shape: f32[4,256], index: 1, kind: input, shape index: {}]
  %s2 = inlined_call_operand.vmem [shape: f32[1,256], index: 2, kind: input, shape index: {}]
  %s3 = inlined_call_operand.hbm [shape: f32[16,128], index: 3, kind: output, shape index: {}]
  %s4 = sld [smem:[#allocation0]]
  $region61: #{tpu_custom_call.1} parent=0
    _
  %s6 = ssub.s32 1, %s4
  %s7 = scalar_select 0, %s6, %s4
  $region1: #{tpu_custom_call.1} parent=0
    #allocation3 [shape = 'u8[4096]{0}', space=vmem, size = 0x1000, scoped, tag = 'input window, operand 0']
    #allocation4 [shape = 's32[2]{0}', space=sflag, size = 0x8, scoped, tag = 'scoped memory for tpu_custom_call.1']
    #allocation5 [shape = 's32[2]{0}', space=sflag, size = 0x8, scoped, tag = 'scoped memory for tpu_custom_call.1']
    #allocation6 [shape = 'u8[4096]{0}', space=vmem, size = 0x1000, scoped, tag = 'input window, operand 1']
    #allocation7 [shape = 's32[2]{0}', space=sflag, size = 0x8, scoped, tag = 'scoped memory for tpu_custom_call.1']
    #allocation8 [shape = 'u8[8192]{0}', space=vmem, size = 0x2000, scoped, tag = 'output window, operand 0']
    %8 = vsyncpa [#allocation4], 0
    %s9 = scalar_lea.sflag [#allocation4], 1
    %10 = vsyncpa %s9, 0
    %11 = vsyncpa [#allocation7], 0
    %s12 = scalar_lea.sflag [#allocation7], 1
    %13 = vsyncpa %s12, 0
    %14 = vsyncpa [#allocation5], 0
    %s15 = scalar_lea.sflag [#allocation5], 1
    %16 = vsyncpa %s15, 0
    loop: start=0, step=1, limit=4
    $region2: #{tpu_custom_call.1} parent=1 // loop_pre_header
      _
    $region3: #{tpu_custom_call.1} parent=1 // loop_header
      %s18 = sphi 0, %s22
      %p19 = scmp.ge.s32.totalorder %s18, 4
      %s25 = sphi 0, %s37
      %s26 = sphi 0, %s33
      %s27 = sphi 0, %s25
      %s28 = sphi 0, %s26
      %s29 = sphi 0, %s27
      %s30 = sphi 0, %s28
      %s42 = sphi 0, %s44
      %s45 = sphi 0, %s42
      %s46 = sphi 0, %s45
      %s62 = sphi 0, %s46
      %s70 = sphi 0, %s72
      %s73 = sphi 0, %s70
      %s74 = sphi 0, %s73
      %s90 = sphi 0, %s74
      %s98 = sphi 0, %s100
      %s101 = sphi 0, %s98
      %s102 = sphi 0, %s101
      %s118 = sphi 0, %s102
      %s124 = sphi 0, %s126
      %s127 = sphi 0, %s124
      %s128 = sphi 0, %s127
      %s144 = sphi 0, %s128
    $region4: #{tpu_custom_call.1} parent=1 // loop_header_branch
      %21 = sbr.rel (%p19) target = $region8
    $region5: #{tpu_custom_call.1} parent=1 // loop_body
      %s23 = ssub.s32 %s18, 1
      %s24 = ssub.s32 %s18, 2
      %s31 = sadd.s32 1, %s26
      %p32 = scmp.ge.s32.totalorder %s31, 1
      %s33 = scalar_select %p32, 0, %s31
      %s34 = sadd.s32 1, %s25
      %s35 = scalar_select %p32, %s34, %s25
      %p36 = scmp.ge.s32.totalorder %s35, 2
      %s37 = scalar_select %p36, 0, %s35
      %s38 = sadd.s32 %s25, %s26
      %s39 = sadd.s32 %s37, %s33
      %s40 = ssub.s32 %s38, %s39
      %p41 = scmp.eq.s32.totalorder %s40, 0
      %s43 = sadd.s32 %s42, 1
      %s44 = scalar_select %p41, %s42, %s43
      %p47 = pneg %p41
      %p48 = scmp.eq.s32.totalorder %s18, 1
      %p49 = por %p47, %p48
      %p50 = scmp.ne.s32.totalorder %s42, %s45
      %p51 = scmp.eq.s32.totalorder %s18, 0
      %p52 = por %p50, %p51
      %p53 = scmp.ne.s32.totalorder %s42, %s45
      %p54 = scmp.eq.s32.totalorder %s23, 1
      %p55 = por %p53, %p54
      %p56 = scmp.ne.s32.totalorder %s45, %s46
      %p57 = scmp.eq.s32.totalorder %s23, 0
      %p58 = por %p56, %p57
      %p59 = scmp.ne.s32.totalorder %s45, %s46
      %p60 = scmp.eq.s32.totalorder %s24, 1
      %p61 = por %p59, %p60
      %p63 = scmp.ne.s32.totalorder %s46, %s62
      %p64 = scmp.eq.s32.totalorder %s24, 0
      %p65 = por %p63, %p64
      %s66 = sadd.s32 %s25, %s26
      %s67 = sadd.s32 %s37, %s33
      %s68 = ssub.s32 %s66, %s67
      %p69 = scmp.eq.s32.totalorder %s68, 0
      %s71 = sadd.s32 %s70, 1
      %s72 = scalar_select %p69, %s70, %s71
      %p75 = pneg %p69
      %p76 = scmp.eq.s32.totalorder %s18, 1
      %p77 = por %p75, %p76
      %p78 = scmp.ne.s32.totalorder %s70, %s73
      %p79 = scmp.eq.s32.totalorder %s18, 0
      %p80 = por %p78, %p79
      %p81 = scmp.ne.s32.totalorder %s70, %s73
      %p82 = scmp.eq.s32.totalorder %s23, 1
      %p83 = por %p81, %p82
      %p84 = scmp.ne.s32.totalorder %s73, %s74
      %p85 = scmp.eq.s32.totalorder %s23, 0
      %p86 = por %p84, %p85
      %p87 = scmp.ne.s32.totalorder %s73, %s74
      %p88 = scmp.eq.s32.totalorder %s24, 1
      %p89 = por %p87, %p88
      %p91 = scmp.ne.s32.totalorder %s74, %s90
      %p92 = scmp.eq.s32.totalorder %s24, 0
      %p93 = por %p91, %p92
      %s94 = sadd.s32 %s25, %s26
      %s95 = sadd.s32 %s37, %s33
      %s96 = ssub.s32 %s94, %s95
      %p97 = scmp.eq.s32.totalorder %s96, 0
      %s99 = sadd.s32 %s98, 1
      %s100 = scalar_select %p97, %s98, %s99
      %p103 = pneg %p97
      %p104 = scmp.eq.s32.totalorder %s18, 1
      %p105 = por %p103, %p104
      %p106 = scmp.ne.s32.totalorder %s98, %s101
      %p107 = scmp.eq.s32.totalorder %s18, 0
      %p108 = por %p106, %p107
      %p109 = scmp.ne.s32.totalorder %s98, %s101
      %p110 = scmp.eq.s32.totalorder %s23, 1
      %p111 = por %p109, %p110
      %p112 = scmp.ne.s32.totalorder %s101, %s102
      %p113 = scmp.eq.s32.totalorder %s23, 0
      %p114 = por %p112, %p113
      %p115 = scmp.ne.s32.totalorder %s101, %s102
      %p116 = scmp.eq.s32.totalorder %s24, 1
      %p117 = por %p115, %p116
      %p119 = scmp.ne.s32.totalorder %s102, %s118
      %p120 = scmp.eq.s32.totalorder %s24, 0
      %p121 = por %p119, %p120
      %s122 = ssub.s32 %s25, %s37
      %p123 = scmp.eq.s32.totalorder %s122, 0
      %s125 = sadd.s32 %s124, 1
      %s126 = scalar_select %p123, %s124, %s125
      %p129 = pneg %p123
      %p130 = scmp.eq.s32.totalorder %s18, 1
      %p131 = por %p129, %p130
      %p132 = scmp.ne.s32.totalorder %s124, %s127
      %p133 = scmp.eq.s32.totalorder %s18, 0
      %p134 = por %p132, %p133
      %p135 = scmp.ne.s32.totalorder %s124, %s127
      %p136 = scmp.eq.s32.totalorder %s23, 1
      %p137 = por %p135, %p136
      %p138 = scmp.ne.s32.totalorder %s127, %s128
      %p139 = scmp.eq.s32.totalorder %s23, 0
      %p140 = por %p138, %p139
      %p141 = scmp.ne.s32.totalorder %s127, %s128
      %p142 = scmp.eq.s32.totalorder %s24, 1
      %p143 = por %p141, %p142
      %p145 = scmp.ne.s32.totalorder %s128, %s144
      %p146 = scmp.eq.s32.totalorder %s24, 0
      %p147 = por %p145, %p146
      %p148 = scmp.le.s32.totalorder 1, %s18
      %p149 = scmp.lt.s32.totalorder %s18, 3
      %p150 = pnand %p148, %p149
      %p151 = pneg %p150
      // Predicated region
      $region9: #{tpu_custom_call.1} parent=5 // pred_check
        _
      $region10: #{tpu_custom_call.1} parent=5 // pred_check_branch
        %153 = sbr.rel (%p150) target = $region12
      $region11: #{tpu_custom_call.1} parent=5 // pred_region
        %s154 = ssub.s32 %s18, 1
      $region12: #{tpu_custom_call.1} parent=5 // pred_fallthru
        _
      %p155 = scmp.lt.s32.totalorder %s18, 2
      // Predicated region
      $region13: #{tpu_custom_call.1} parent=5 // pred_check
        %p156 = pneg %p155
      $region14: #{tpu_custom_call.1} parent=5 // pred_check_branch
        %158 = sbr.rel (%p156) target = $region16
      $region15: #{tpu_custom_call.1} parent=5 // pred_region
        // Predicated region
        $region17: #{tpu_custom_call.1} parent=15 // pred_check
          %p159 = pneg %p52
        $region18: #{tpu_custom_call.1} parent=15 // pred_check_branch
          %161 = sbr.rel (%p159) target = $region20
        $region19: #{tpu_custom_call.1} parent=15 // pred_region
          %s162 = sand.u32 %s42, 1
          %s163 = scalar_lea.sflag [#allocation4], %s162
          %s164 = sand.u32 %s42, 1
          %s165 = smul.addr %s164, 4
          %s166 = scalar_lea.vmem [#allocation3], %s165
          %s167 = sadd.s32 %s25, %s26
          %s169 = ssub.s32 64, 64
          %170 = vsyncadd %s163, %s169
          %s171 = smul.addr %s167, 64
          %s172 = scalar_lea.hbm %s0, %s171
          %s174 = sshll.u32 %s166, 4
          %s175 = int_to_ptr.vmem [resolvable:$true] %s174
          %177 = dma.hbm_to_vmem [thread:$0]  %s172, 64, %s175, %s163
        $region20: #{tpu_custom_call.1} parent=15 // pred_fallthru
          _
        // Predicated region
        $region21: #{tpu_custom_call.1} parent=15 // pred_check
          %p178 = pneg %p80
        $region22: #{tpu_custom_call.1} parent=15 // pred_check_branch
          %180 = sbr.rel (%p178) target = $region24
        $region23: #{tpu_custom_call.1} parent=15 // pred_region
          %s181 = sand.u32 %s70, 1
          %s182 = scalar_lea.sflag [#allocation7], %s181
          %s183 = sand.u32 %s70, 1
          %s184 = smul.addr %s183, 4
          %s185 = scalar_lea.vmem [#allocation6], %s184
          %s186 = sadd.s32 %s25, %s26
          %s188 = ssub.s32 64, 64
          %189 = vsyncadd %s182, %s188
          %s190 = smul.addr %s186, 64
          %s191 = scalar_lea.hbm %s1, %s190
          %s193 = sshll.u32 %s185, 4
          %s194 = int_to_ptr.vmem [resolvable:$true] %s193
          %196 = dma.hbm_to_vmem [thread:$0]  %s191, 64, %s194, %s182
        $region24: #{tpu_custom_call.1} parent=15 // pred_fallthru
          _
        // Predicated region
        $region25: #{tpu_custom_call.1} parent=15 // pred_check
          %p197 = pneg %p108
        $region26: #{tpu_custom_call.1} parent=15 // pred_check_branch
          %199 = sbr.rel (%p197) target = $region28
        $region27: #{tpu_custom_call.1} parent=15 // pred_region
          %s200 = sadd.s32 %s25, %s26
          %p201 = scmp.lt.s32.totalorder %s200, 1
          %s202 = scalar_select %p201, %s200, 1
          %s203 = scalar_lea.vmem %s2, %s202
          %s204 = sadd.s32 %s25, %s26
        $region28: #{tpu_custom_call.1} parent=15 // pred_fallthru
          _
      $region16: #{tpu_custom_call.1} parent=5 // pred_fallthru
        _
      %p205 = scmp.le.s32.totalorder 1, %s18
      %p206 = scmp.lt.s32.totalorder %s18, 3
      %p207 = pnand %p205, %p206
      %p208 = pneg %p207
      // Predicated region
      $region29: #{tpu_custom_call.1} parent=5 // pred_check
        _
      $region30: #{tpu_custom_call.1} parent=5 // pred_check_branch
        %210 = sbr.rel (%p207) target = $region32
      $region31: #{tpu_custom_call.1} parent=5 // pred_region
        %s211 = ssub.s32 %s18, 1
        %s212 = sand.u32 %s45, 1
        %s213 = scalar_lea.sflag [#allocation4], %s212
        %s214 = sand.u32 %s45, 1
        %s215 = smul.addr %s214, 4
        %s216 = scalar_lea.vmem [#allocation3], %s215
        // Predicated region
        $region33: #{tpu_custom_call.1} parent=31 // pred_check
          %p217 = pneg %p58
        $region34: #{tpu_custom_call.1} parent=31 // pred_check_branch
          %219 = sbr.rel (%p217) target = $region36
        $region35: #{tpu_custom_call.1} parent=31 // pred_region
          %220 = dma.done %s213, 64
        $region36: #{tpu_custom_call.1} parent=31 // pred_fallthru
          _
        %s221 = sand.u32 %s73, 1
        %s222 = scalar_lea.sflag [#allocation7], %s221
        %s223 = sand.u32 %s73, 1
        %s224 = smul.addr %s223, 4
        %s225 = scalar_lea.vmem [#allocation6], %s224
        // Predicated region
        $region37: #{tpu_custom_call.1} parent=31 // pred_check
          %p226 = pneg %p86
        $region38: #{tpu_custom_call.1} parent=31 // pred_check_branch
          %228 = sbr.rel (%p226) target = $region40
        $region39: #{tpu_custom_call.1} parent=31 // pred_region
          %229 = dma.done %s222, 64
        $region40: #{tpu_custom_call.1} parent=31 // pred_fallthru
          _
        %s230 = sand.u32 %s45, 1
        %s231 = scalar_lea.sflag [#allocation4], %s230
        %s232 = sand.u32 %s45, 1
        %s233 = smul.addr %s232, 4
        %s234 = scalar_lea.vmem [#allocation3], %s233
        %p235 = pneg %p58
        %p236 = pneg %p55
        %s237 = sand.u32 %s73, 1
        %s238 = scalar_lea.sflag [#allocation7], %s237
        %s239 = sand.u32 %s73, 1
        %s240 = smul.addr %s239, 4
        %s241 = scalar_lea.vmem [#allocation6], %s240
        %p242 = pneg %p86
        %p243 = pneg %p83
        %s244 = sadd.s32 %s27, %s28
        %p245 = scmp.lt.s32.totalorder %s244, 1
        %s246 = scalar_select %p245, %s244, 1
        %s247 = scalar_lea.vmem %s2, %s246
        %p248 = pneg %p114
        %p249 = pneg %p111
        %p250 = pneg %p140
        %p251 = pneg %p137
        %s252 = sand.u32 %s127, 1
        %s253 = scalar_lea.sflag [#allocation5], %s252
        %s254 = sand.u32 %s127, 1
        %s255 = smul.addr %s254, 8
        %s256 = scalar_lea.vmem [#allocation8], %s255
        %s257 = sadd.s32 %s27, %s28
        %s258 = sadd.s32 %s27, %s28
        %s259 = sadd.s32 %s27, %s28
        %p260 = scmp.lt.s32.totalorder %s259, 1
        %s261 = scalar_select %p260, %s259, 1
        %s262 = scalar_lea.vmem %s2, %s261
        %s263 = sadd.s32 %s27, %s28
        %p264 = scmp.eq.s32.totalorder %s28, 0
        // Predicated region
        $region41: #{tpu_custom_call.1} parent=31 // pred_check
          %p265 = pneg %p264
        $region42: #{tpu_custom_call.1} parent=31 // pred_check_branch
          %267 = sbr.rel (%p265) target = $region44
        $region43: #{tpu_custom_call.1} parent=31 // pred_region
          %268 = vst [vmem:[#allocation2] sm:$0xf] 0.0
        $region44: #{tpu_custom_call.1} parent=31 // pred_fallthru
          _
        %v269 = vld [vmem:[%s216] sm:$0xf]
        %v270 = vld [vmem:[%s225] sm:$0xf]
        %v271 = vsub.f32 %v269, %v270
        %v272 = vld [vmem:[#allocation2] sm:$0xf]
        %v273 = vmul.f32 %v271, %v271
        %v274 = vld [vmem:[%s262] sm:$0x1]
        %v276 = vlaneseq
        %v277 = vshrl.u32 %v276, 7
        %v278 = vsub.s32 0, %v277
        %v279 = vrot.slane %v274, %v278
        %v281 = vmul.f32 %v273, %v279
        %v282 = vadd.f32 %v272, %v281
        %283 = vst [vmem:[#allocation2] sm:$0xf] %v282
        // Predicated region
        $region45: #{tpu_custom_call.1} parent=31 // pred_check
          %p284 = pneg %p264
        $region46: #{tpu_custom_call.1} parent=31 // pred_check_branch
          %286 = sbr.rel (%p284) target = $region48
        $region47: #{tpu_custom_call.1} parent=31 // pred_region
          %v287 = vld [vmem:[#allocation2] sm:$0xf]
          %vm288 = vcmask 1043456
          %v289 = vsel %vm288, %v287, 0.0
          %290 = vadd.xlane.f32.xlu0 %v289
          %v291 = vpop.xlane.xlu0 %290
          %v292 = vrot.slane %v291, 4
          %v293 = vadd.f32 %v291, %v292
          %v294 = vrot.slane %v293, 2
          %v295 = vadd.f32 %v293, %v294
          %v296 = vrot.slane %v295, 1
          %v297 = vadd.f32 %v295, %v296
          %s298 = vtos %v297
          %v299 = vlaneseq
          %v300 = vshrl.u32 %v299, 7
          %v301 = vlaneseq
          %v302 = vand.u32 %v301, 127
          %vm303 = vcmp.eq.s32.totalorder %v300, 0
          %vm304 = vcmp.eq.s32.totalorder %v302, 0
          %vm305 = vmand %vm303, %vm304
          %v306 = vstv %s298
          %v307 = vsel %vm305, %v306, 0.0
          %308 = vst [vmem:[%s256] sm:$0xff] %v307
        $region48: #{tpu_custom_call.1} parent=31 // pred_fallthru
          _
        %s309 = sand.u32 %s127, 1
        %s310 = scalar_lea.sflag [#allocation5], %s309
        %s311 = sand.u32 %s127, 1
        %s312 = smul.addr %s311, 8
        %s313 = scalar_lea.vmem [#allocation8], %s312
        // Predicated region
        $region49: #{tpu_custom_call.1} parent=31 // pred_check
          %p314 = pneg %p137
        $region50: #{tpu_custom_call.1} parent=31 // pred_check_branch
          %316 = sbr.rel (%p314) target = $region52
        $region51: #{tpu_custom_call.1} parent=31 // pred_region
          %s318 = ssub.s32 128, 128
          %319 = vsyncadd %s310, %s318
          %s320 = smul.addr %s27, 128
          %s321 = scalar_lea.hbm %s3, %s320
          %s323 = sshll.u32 %s313, 4
          %s324 = int_to_ptr.vmem [resolvable:$true] %s323
          %326 = dma.vmem_to_hbm [thread:$0]  %s324, 128, %s321, %s310
        $region52: #{tpu_custom_call.1} parent=31 // pred_fallthru
          _
      $region32: #{tpu_custom_call.1} parent=5 // pred_fallthru
        _
      %p327 = scmp.le.s32.totalorder 2, %s18
      // Predicated region
      $region53: #{tpu_custom_call.1} parent=5 // pred_check
        %p328 = pneg %p327
      $region54: #{tpu_custom_call.1} parent=5 // pred_check_branch
        %330 = sbr.rel (%p328) target = $region56
      $region55: #{tpu_custom_call.1} parent=5 // pred_region
        %s331 = ssub.s32 %s18, 2
        // Predicated region
        $region57: #{tpu_custom_call.1} parent=55 // pred_check
          %p332 = pneg %p143
        $region58: #{tpu_custom_call.1} parent=55 // pred_check_branch
          %334 = sbr.rel (%p332) target = $region60
        $region59: #{tpu_custom_call.1} parent=55 // pred_region
          %s335 = sand.u32 %s128, 1
          %s336 = scalar_lea.sflag [#allocation5], %s335
          %s337 = sand.u32 %s128, 1
          %s338 = smul.addr %s337, 8
          %s339 = scalar_lea.vmem [#allocation8], %s338
          %340 = dma.done %s336, 128
        $region60: #{tpu_custom_call.1} parent=55 // pred_fallthru
          _
      $region56: #{tpu_custom_call.1} parent=5 // pred_fallthru
        _
    $region6: #{tpu_custom_call.1} parent=1 // loop_footer
      %s22 = sadd.s32 1, %s18
    $region7: #{tpu_custom_call.1} parent=1 // loop_footer_branch
      %17 = sbr.rel target = $region3
    $region8: #{tpu_custom_call.1} parent=1 // loop_exit
      _
    %341 = vsyncpa [#allocation4], 1
    %s342 = scalar_lea.sflag [#allocation4], 1
    %343 = vsyncpa %s342, 1
    %344 = vsyncpa [#allocation7], 1
    %s345 = scalar_lea.sflag [#allocation7], 1
    %346 = vsyncpa %s345, 1
    %347 = vsyncpa [#allocation5], 1
    %s348 = scalar_lea.sflag [#allocation5], 1
    %349 = vsyncpa %s348, 1

</llo_original>
